<compile_context>
chip_gen: v7x
topology: tpu7x:2x2x1
jax: 0.10.0
libtpu: 0.0.40
codegen_flags: <defaults>
</compile_context>

<pallas_src>
import jax
import jax.numpy as jnp
from jax.experimental import pallas as pl
from jax.experimental.pallas import tpu as pltpu


def mlp_kernel(x_ref, w1_ref, b1_ref, w2_ref, b2_ref, w3_ref, b3_ref,
               w4_ref, b4_ref, o_ref):
    # Cast x f32 -> bf16 here, in VMEM, so no bf16 copy of x ever hits HBM.
    x = x_ref[...].astype(jnp.bfloat16)

    # layer1 + ReLU
    h = jnp.dot(x, w1_ref[...], preferred_element_type=jnp.float32) + b1_ref[...]
    h = jnp.maximum(h, 0.0)
    # layer2 + ReLU
    h = jnp.dot(h.astype(jnp.bfloat16), w2_ref[...],
                preferred_element_type=jnp.float32) + b2_ref[...]
    h = jnp.maximum(h, 0.0)
    # layer3 + ReLU
    h = jnp.dot(h.astype(jnp.bfloat16), w3_ref[...],
                preferred_element_type=jnp.float32) + b3_ref[...]
    h = jnp.maximum(h, 0.0)
    # outlayer + ReLU (matches the spec: ReLU before softmax)
    h = jnp.dot(h.astype(jnp.bfloat16), w4_ref[...],
                preferred_element_type=jnp.float32) + b4_ref[...]
    h = jnp.maximum(h, 0.0)

    # Numerically stable softmax over the 10-class dim. Exact divide (not the
    # approx EUP reciprocal): at 10 lanes the cost is negligible and rows sum
    # to 1 at f32 precision, matching torch.softmax.
    m = jnp.max(h, axis=-1, keepdims=True)
    e = jnp.exp(h - m)
    s = jnp.sum(e, axis=-1, keepdims=True)
    o_ref[...] = (e / s).astype(o_ref.dtype)


def init_params(key):
    """Deterministic init mimicking nn.Linear default uniform(-1/sqrt(fan_in), +)."""
    dims = [(784, 32), (32, 64), (64, 128), (128, 10)]
    params = []
    for i, (fan_in, fan_out) in enumerate(dims):
        kw, kb, key = jax.random.split(jax.random.fold_in(key, i), 3)
        bound = 1.0 / jnp.sqrt(fan_in)
        w = jax.random.uniform(kw, (fan_in, fan_out), jnp.float32, -bound, bound)
        b = jax.random.uniform(kb, (1, fan_out), jnp.float32, -bound, bound)
        params += [w, b]
    return tuple(params)


def prepare_params(params):
    """One-time prep (outside the per-call path): weights -> bf16, biases -> f32 (1, N)."""
    w1, b1, w2, b2, w3, b3, w4, b4 = params
    return (w1.astype(jnp.bfloat16), b1.reshape(1, -1).astype(jnp.float32),
            w2.astype(jnp.bfloat16), b2.reshape(1, -1).astype(jnp.float32),
            w3.astype(jnp.bfloat16), b3.reshape(1, -1).astype(jnp.float32),
            w4.astype(jnp.bfloat16), b4.reshape(1, -1).astype(jnp.float32))


def _round_up(n, m):
    return ((n + m - 1) // m) * m


def _mlp_tiles(x2, prepped, tb):
    """Run the MLP over x2 (rows % tb == 0) with a batch-tiled grid."""
    bm = x2.shape[0]
    assert bm % tb == 0 and bm > 0
    # Weights/biases: same block every step -> VMEM-resident across the grid.
    # (Their dead second pipeline buffer is < 100 KiB total, so not worth Buffered(1).)
    resident = lambda shape: pl.BlockSpec(shape, lambda i: (0,) * len(shape))
    return pl.pallas_call(
        mlp_kernel,
        out_shape=jax.ShapeDtypeStruct((bm, 10), jnp.float32),
        grid=(bm // tb,),
        in_specs=[
            pl.BlockSpec((tb, 784), lambda i: (i, 0)),   # streamed / double-buffered
            resident((784, 32)), resident((1, 32)),
            resident((32, 64)),  resident((1, 64)),
            resident((64, 128)), resident((1, 128)),
            resident((128, 10)), resident((1, 10)),
        ],
        out_specs=pl.BlockSpec((tb, 10), lambda i: (i, 0)),
        compiler_params=pltpu.CompilerParams(
            dimension_semantics=("parallel",),  # batch tiles shard across v7x's 2 TCs
        ),
    )(x2, *prepped)


def network_3_forward(x, prepped_params, *, tb_max=1024):
    """x: (B, 1, 28, 28) or (B, 784) float32. Returns (B, 10) softmax probs (f32).

    prepped_params: output of prepare_params (bf16 weights, f32 (1, N) biases).
    tb_max=1024 is safe for v5e's 16 MiB scoped-VMEM default; it can be raised on
    v6e together with pltpu.CompilerParams(vmem_limit_bytes=...) for huge batches.
    """
    B = x.shape[0]
    x2 = x.reshape(B, -1).astype(jnp.float32)  # stays f32; bf16 cast happens in-kernel
    assert x2.shape[1] == 784

    # Tile size: multiple of 8 (sublane), <= tb_max, and >= 2 tiles when the batch
    # allows so the "parallel" grid axis can actually use both v7x TensorCores.
    if B <= 8:
        tb = 8
    else:
        n_tiles = max(2, pl.cdiv(B, tb_max))
        tb = max(8, min(tb_max, (B // n_tiles) // 8 * 8))

    b_main = (B // tb) * tb
    outs = []
    if b_main > 0:
        # Aligned prefix; when B % tb == 0 this is the full array (slice elided).
        outs.append(_mlp_tiles(x2[:b_main], prepped_params, tb))
    tail = B - b_main
    if tail > 0:
        tb_t = _round_up(tail, 8)
        xt = x2[b_main:]
        if tb_t != tail:
            xt = jnp.pad(xt, ((0, tb_t - tail), (0, 0)))  # O(tile) pad, not O(B)
        outs.append(_mlp_tiles(xt, prepped_params, tb_t)[:tail])
    return outs[0] if len(outs) == 1 else jnp.concatenate(outs, axis=0)


if __name__ == "__main__":
    key = jax.random.PRNGKey(0)
    kx, kp = jax.random.split(key)
    # MNIST-like input: batch=8, 1x28x28 -> flattened to 784 features
    x = jax.random.normal(kx, (8, 1, 28, 28), dtype=jnp.float32)
    prepped = prepare_params(init_params(kp))

    fwd = jax.jit(lambda xx: network_3_forward(xx, prepped))
    out = jax.block_until_ready(fwd(x))

    # sanity: shape, rows of softmax sum to 1 (exact f32 divide), non-negative probs
    assert out.shape == (8, 10)
    assert jnp.allclose(jnp.sum(out, axis=1), 1.0, atol=1e-4)
    assert bool(jnp.all(out >= 0.0))
    print("KERNEL_OK")
</pallas_src>

<mosaic_0001>
module attributes {stable_mosaic.version = 11 : i64} {
  func.func @mlp_kernel(%arg0: i32, %arg1: memref<8x784xf32, #tpu.memory_space<vmem>>, %arg2: memref<784x32xbf16, #tpu.memory_space<vmem>>, %arg3: memref<1x32xf32, #tpu.memory_space<vmem>>, %arg4: memref<32x64xbf16, #tpu.memory_space<vmem>>, %arg5: memref<1x64xf32, #tpu.memory_space<vmem>>, %arg6: memref<64x128xbf16, #tpu.memory_space<vmem>>, %arg7: memref<1x128xf32, #tpu.memory_space<vmem>>, %arg8: memref<128x10xbf16, #tpu.memory_space<vmem>>, %arg9: memref<1x10xf32, #tpu.memory_space<vmem>>, %arg10: memref<8x10xf32, #tpu.memory_space<vmem>>) attributes {dimension_semantics = [#tpu.dimension_semantics<parallel>], iteration_bounds = array<i64: 1>, scalar_prefetch = 0 : i64, scratch_operands = 0 : i64, tpu.core_type = #tpu.core_type<tc>, window_params = [{transform_indices = @transform_0, window_bounds = array<i64: 8, 784>}, {pipeline_mode = #tpu.pipeline_mode<synchronous>, transform_indices = @transform_1, window_bounds = array<i64: 784, 32>}, {pipeline_mode = #tpu.pipeline_mode<synchronous>, transform_indices = @transform_2, window_bounds = array<i64: 1, 32>}, {pipeline_mode = #tpu.pipeline_mode<synchronous>, transform_indices = @transform_3, window_bounds = array<i64: 32, 64>}, {pipeline_mode = #tpu.pipeline_mode<synchronous>, transform_indices = @transform_4, window_bounds = array<i64: 1, 64>}, {pipeline_mode = #tpu.pipeline_mode<synchronous>, transform_indices = @transform_5, window_bounds = array<i64: 64, 128>}, {pipeline_mode = #tpu.pipeline_mode<synchronous>, transform_indices = @transform_6, window_bounds = array<i64: 1, 128>}, {pipeline_mode = #tpu.pipeline_mode<synchronous>, transform_indices = @transform_7, window_bounds = array<i64: 128, 10>}, {pipeline_mode = #tpu.pipeline_mode<synchronous>, transform_indices = @transform_8, window_bounds = array<i64: 1, 10>}, {transform_indices = @transform_9, window_bounds = array<i64: 8, 10>}]} {
    %c0 = arith.constant 0 : index
    %c0_0 = arith.constant 0 : index
    %0 = vector.load %arg1[%c0, %c0_0] : memref<8x784xf32, #tpu.memory_space<vmem>>, vector<8x784xf32>
    %1 = arith.truncf %0 : vector<8x784xf32> to vector<8x784xbf16>
    %c0_1 = arith.constant 0 : index
    %c0_2 = arith.constant 0 : index
    %2 = vector.load %arg2[%c0_1, %c0_2] : memref<784x32xbf16, #tpu.memory_space<vmem>>, vector<784x32xbf16>
    %cst = arith.constant dense<0.000000e+00> : vector<8x32xf32>
    %3 = tpu.matmul %1, %2, %cst {dimension_numbers = #tpu.dot_dimension_numbers<[1], [0], [0], [1], [0, 0, 1, 1], [], []>} : vector<8x784xbf16>, vector<784x32xbf16>, vector<8x32xf32> -> vector<8x32xf32>
    %c0_3 = arith.constant 0 : index
    %c0_4 = arith.constant 0 : index
    %4 = vector.load %arg3[%c0_3, %c0_4] : memref<1x32xf32, #tpu.memory_space<vmem>>, vector<1x32xf32>
    %5 = vector.broadcast %4 : vector<1x32xf32> to vector<8x32xf32>
    %6 = arith.addf %3, %5 : vector<8x32xf32>
    %cst_5 = arith.constant 0.000000e+00 : f32
    %7 = vector.broadcast %cst_5 : f32 to vector<8x32xf32>
    %8 = arith.maximumf %6, %7 : vector<8x32xf32>
    %9 = arith.truncf %8 : vector<8x32xf32> to vector<8x32xbf16>
    %c0_6 = arith.constant 0 : index
    %c0_7 = arith.constant 0 : index
    %10 = vector.load %arg4[%c0_6, %c0_7] : memref<32x64xbf16, #tpu.memory_space<vmem>>, vector<32x64xbf16>
    %cst_8 = arith.constant dense<0.000000e+00> : vector<8x64xf32>
    %11 = tpu.matmul %9, %10, %cst_8 {dimension_numbers = #tpu.dot_dimension_numbers<[1], [0], [0], [1], [0, 0, 1, 1], [], []>} : vector<8x32xbf16>, vector<32x64xbf16>, vector<8x64xf32> -> vector<8x64xf32>
    %c0_9 = arith.constant 0 : index
    %c0_10 = arith.constant 0 : index
    %12 = vector.load %arg5[%c0_9, %c0_10] : memref<1x64xf32, #tpu.memory_space<vmem>>, vector<1x64xf32>
    %13 = vector.broadcast %12 : vector<1x64xf32> to vector<8x64xf32>
    %14 = arith.addf %11, %13 : vector<8x64xf32>
    %cst_11 = arith.constant 0.000000e+00 : f32
    %15 = vector.broadcast %cst_11 : f32 to vector<8x64xf32>
    %16 = arith.maximumf %14, %15 : vector<8x64xf32>
    %17 = arith.truncf %16 : vector<8x64xf32> to vector<8x64xbf16>
    %c0_12 = arith.constant 0 : index
    %c0_13 = arith.constant 0 : index
    %18 = vector.load %arg6[%c0_12, %c0_13] : memref<64x128xbf16, #tpu.memory_space<vmem>>, vector<64x128xbf16>
    %cst_14 = arith.constant dense<0.000000e+00> : vector<8x128xf32>
    %19 = tpu.matmul %17, %18, %cst_14 {dimension_numbers = #tpu.dot_dimension_numbers<[1], [0], [0], [1], [0, 0, 1, 1], [], []>} : vector<8x64xbf16>, vector<64x128xbf16>, vector<8x128xf32> -> vector<8x128xf32>
    %c0_15 = arith.constant 0 : index
    %c0_16 = arith.constant 0 : index
    %20 = vector.load %arg7[%c0_15, %c0_16] : memref<1x128xf32, #tpu.memory_space<vmem>>, vector<1x128xf32>
    %21 = vector.broadcast %20 : vector<1x128xf32> to vector<8x128xf32>
    %22 = arith.addf %19, %21 : vector<8x128xf32>
    %cst_17 = arith.constant 0.000000e+00 : f32
    %23 = vector.broadcast %cst_17 : f32 to vector<8x128xf32>
    %24 = arith.maximumf %22, %23 : vector<8x128xf32>
    %25 = arith.truncf %24 : vector<8x128xf32> to vector<8x128xbf16>
    %c0_18 = arith.constant 0 : index
    %c0_19 = arith.constant 0 : index
    %26 = vector.load %arg8[%c0_18, %c0_19] : memref<128x10xbf16, #tpu.memory_space<vmem>>, vector<128x10xbf16>
    %cst_20 = arith.constant dense<0.000000e+00> : vector<8x10xf32>
    %27 = tpu.matmul %25, %26, %cst_20 {dimension_numbers = #tpu.dot_dimension_numbers<[1], [0], [0], [1], [0, 0, 1, 1], [], []>} : vector<8x128xbf16>, vector<128x10xbf16>, vector<8x10xf32> -> vector<8x10xf32>
    %c0_21 = arith.constant 0 : index
    %c0_22 = arith.constant 0 : index
    %28 = vector.load %arg9[%c0_21, %c0_22] : memref<1x10xf32, #tpu.memory_space<vmem>>, vector<1x10xf32>
    %29 = vector.broadcast %28 : vector<1x10xf32> to vector<8x10xf32>
    %30 = arith.addf %27, %29 : vector<8x10xf32>
    %cst_23 = arith.constant 0.000000e+00 : f32
    %31 = vector.broadcast %cst_23 : f32 to vector<8x10xf32>
    %32 = arith.maximumf %30, %31 : vector<8x10xf32>
    %cst_24 = arith.constant dense<0xFF800000> : vector<8xf32>
    %33 = vector.multi_reduction <maximumf>, %32, %cst_24 [1] : vector<8x10xf32> to vector<8xf32>
    %34 = vector.shape_cast %33 : vector<8xf32> to vector<8x1xf32>
    %35 = vector.broadcast %34 : vector<8x1xf32> to vector<8x10xf32>
    %36 = arith.subf %32, %35 : vector<8x10xf32>
    %37 = math.exp %36 : vector<8x10xf32>
    %cst_25 = arith.constant dense<0.000000e+00> : vector<8xf32>
    %38 = vector.multi_reduction <add>, %37, %cst_25 [1] : vector<8x10xf32> to vector<8xf32>
    %39 = vector.shape_cast %38 : vector<8xf32> to vector<8x1xf32>
    %40 = vector.broadcast %39 : vector<8x1xf32> to vector<8x10xf32>
    %41 = arith.divf %37, %40 : vector<8x10xf32>
    %c0_26 = arith.constant 0 : index
    %c0_27 = arith.constant 0 : index
    %42 = vector.load %arg10[%c0_26, %c0_27] : memref<8x10xf32, #tpu.memory_space<vmem>>, vector<8x10xf32>
    tpu.vector_store %arg10[%c0_26, %c0_27], %41 {strides = array<i32>} : memref<8x10xf32, #tpu.memory_space<vmem>>, vector<8x10xf32>,
    return
  }
  func.func @transform_0(%arg0: i32) -> (i32, i32) {
    %c0_i32 = arith.constant 0 : i32
    %c0_i32_0 = arith.constant 0 : i32
    return %arg0, %c0_i32 : i32, i32
  }
  func.func @transform_1(%arg0: i32) -> (i32, i32) {
    %c0_i32 = arith.constant 0 : i32
    %c0_i32_0 = arith.constant 0 : i32
    %c0_i32_1 = arith.constant 0 : i32
    return %c0_i32, %c0_i32_0 : i32, i32
  }
  func.func @transform_2(%arg0: i32) -> (i32, i32) {
    %c0_i32 = arith.constant 0 : i32
    %c0_i32_0 = arith.constant 0 : i32
    %c0_i32_1 = arith.constant 0 : i32
    return %c0_i32, %c0_i32_0 : i32, i32
  }
  func.func @transform_3(%arg0: i32) -> (i32, i32) {
    %c0_i32 = arith.constant 0 : i32
    %c0_i32_0 = arith.constant 0 : i32
    %c0_i32_1 = arith.constant 0 : i32
    return %c0_i32, %c0_i32_0 : i32, i32
  }
  func.func @transform_4(%arg0: i32) -> (i32, i32) {
    %c0_i32 = arith.constant 0 : i32
    %c0_i32_0 = arith.constant 0 : i32
    %c0_i32_1 = arith.constant 0 : i32
    return %c0_i32, %c0_i32_0 : i32, i32
  }
  func.func @transform_5(%arg0: i32) -> (i32, i32) {
    %c0_i32 = arith.constant 0 : i32
    %c0_i32_0 = arith.constant 0 : i32
    %c0_i32_1 = arith.constant 0 : i32
    return %c0_i32, %c0_i32_0 : i32, i32
  }
  func.func @transform_6(%arg0: i32) -> (i32, i32) {
    %c0_i32 = arith.constant 0 : i32
    %c0_i32_0 = arith.constant 0 : i32
    %c0_i32_1 = arith.constant 0 : i32
    return %c0_i32, %c0_i32_0 : i32, i32
  }
  func.func @transform_7(%arg0: i32) -> (i32, i32) {
    %c0_i32 = arith.constant 0 : i32
    %c0_i32_0 = arith.constant 0 : i32
    %c0_i32_1 = arith.constant 0 : i32
    return %c0_i32, %c0_i32_0 : i32, i32
  }
  func.func @transform_8(%arg0: i32) -> (i32, i32) {
    %c0_i32 = arith.constant 0 : i32
    %c0_i32_0 = arith.constant 0 : i32
    %c0_i32_1 = arith.constant 0 : i32
    return %c0_i32, %c0_i32_0 : i32, i32
  }
  func.func @transform_9(%arg0: i32) -> (i32, i32) {
    %c0_i32 = arith.constant 0 : i32
    %c0_i32_0 = arith.constant 0 : i32
    return %arg0, %c0_i32 : i32, i32
  }
}

</mosaic_0001>

<llo_original>
// kernel: _lambda_.1
$region0: #{_lambda_.1}
  #allocation0 [shape = 'u32[]', space=smem, size = 0x4, offset = 0x4, fixed_abs, tag = 'smem constant byte address 0x4 - core index']
  #allocation1 [shape = 'u32[144,128]{1,0:T(1,128)}', space=vmem, size = 0x12000, scoped, tag = 'internal scratch']
  %s0 = inlined_call_operand.vmem [shape: f32[8,784], index: 0, kind: input, shape index: {}]
  %s1 = inlined_call_operand.vmem [shape: bf16[784,32], index: 1, kind: input, shape index: {}]
  %s2 = inlined_call_operand.vmem [shape: f32[1,32], index: 2, kind: input, shape index: {}]
  %s3 = inlined_call_operand.vmem [shape: bf16[32,64], index: 3, kind: input, shape index: {}]
  %s4 = inlined_call_operand.vmem [shape: f32[1,64], index: 4, kind: input, shape index: {}]
  %s5 = inlined_call_operand.vmem [shape: bf16[64,128], index: 5, kind: input, shape index: {}]
  %s6 = inlined_call_operand.vmem [shape: f32[1,128], index: 6, kind: input, shape index: {}]
  %s7 = inlined_call_operand.vmem [shape: bf16[128,10], index: 7, kind: input, shape index: {}]
  %s8 = inlined_call_operand.vmem [shape: f32[1,10], index: 8, kind: input, shape index: {}]
  %s9 = inlined_call_operand.hbm [shape: f32[8,10], index: 9, kind: output, shape index: {}]
  %s10 = sld [smem:[#allocation0]]
  $region46: #{_lambda_.1} parent=0
    _
  %s12 = ssub.s32 1, %s10
  %s13 = scalar_select 0, %s12, %s10
  $region1: #{_lambda_.1} parent=0
    #allocation2 [shape = 'u8[4096]{0}', space=vmem, size = 0x1000, scoped, tag = 'output window, operand 0, single buffered']
    #allocation3 [shape = 's32[1]{0}', space=sflag, size = 0x4, scoped, tag = 'scoped memory for _lambda_.1']
    %14 = vsyncpa [#allocation3], 0
    // Predicated region
    $region2: #{_lambda_.1} parent=1 // pred_check
      _
    $region3: #{_lambda_.1} parent=1 // pred_check_branch
      %16 = sbr.rel (0) target = $region5
    $region4: #{_lambda_.1} parent=1 // pred_region
      _
    $region5: #{_lambda_.1} parent=1 // pred_fallthru
      _
    // Predicated region
    $region6: #{_lambda_.1} parent=1 // pred_check
      _
    $region7: #{_lambda_.1} parent=1 // pred_check_branch
      %18 = sbr.rel (0) target = $region9
    $region8: #{_lambda_.1} parent=1 // pred_region
      _
    $region9: #{_lambda_.1} parent=1 // pred_fallthru
      _
    // Predicated region
    $region10: #{_lambda_.1} parent=1 // pred_check
      _
    $region11: #{_lambda_.1} parent=1 // pred_check_branch
      %20 = sbr.rel (0) target = $region13
    $region12: #{_lambda_.1} parent=1 // pred_region
      _
    $region13: #{_lambda_.1} parent=1 // pred_fallthru
      _
    // Predicated region
    $region14: #{_lambda_.1} parent=1 // pred_check
      _
    $region15: #{_lambda_.1} parent=1 // pred_check_branch
      %22 = sbr.rel (0) target = $region17
    $region16: #{_lambda_.1} parent=1 // pred_region
      _
    $region17: #{_lambda_.1} parent=1 // pred_fallthru
      _
    // Predicated region
    $region18: #{_lambda_.1} parent=1 // pred_check
      _
    $region19: #{_lambda_.1} parent=1 // pred_check_branch
      %24 = sbr.rel (0) target = $region21
    $region20: #{_lambda_.1} parent=1 // pred_region
      _
    $region21: #{_lambda_.1} parent=1 // pred_fallthru
      _
    // Predicated region
    $region22: #{_lambda_.1} parent=1 // pred_check
      _
    $region23: #{_lambda_.1} parent=1 // pred_check_branch
      %26 = sbr.rel (0) target = $region25
    $region24: #{_lambda_.1} parent=1 // pred_region
      _
    $region25: #{_lambda_.1} parent=1 // pred_fallthru
      _
    // Predicated region
    $region26: #{_lambda_.1} parent=1 // pred_check
      _
    $region27: #{_lambda_.1} parent=1 // pred_check_branch
      %28 = sbr.rel (0) target = $region29
    $region28: #{_lambda_.1} parent=1 // pred_region
      _
    $region29: #{_lambda_.1} parent=1 // pred_fallthru
      _
    // Predicated region
    $region30: #{_lambda_.1} parent=1 // pred_check
      _
    $region31: #{_lambda_.1} parent=1 // pred_check_branch
      %30 = sbr.rel (0) target = $region33
    $region32: #{_lambda_.1} parent=1 // pred_region
      _
    $region33: #{_lambda_.1} parent=1 // pred_fallthru
      _
    // Predicated region
    $region34: #{_lambda_.1} parent=1 // pred_check
      _
    $region35: #{_lambda_.1} parent=1 // pred_check_branch
      %32 = sbr.rel (0) target = $region37
    $region36: #{_lambda_.1} parent=1 // pred_region
      _
    $region37: #{_lambda_.1} parent=1 // pred_fallthru
      _
    %v34 = vld [vmem:[%s0] sm:$0xff]
    %v35 = vld [vmem:[%s0 + $0x8] sm:$0xff]
    %v36 = vld [vmem:[%s0 + $0x10] sm:$0xff]
    %v37 = vld [vmem:[%s0 + $0x18] sm:$0xff]
    %v38 = vld [vmem:[%s0 + $0x20] sm:$0xff]
    %v39 = vld [vmem:[%s0 + $0x28] sm:$0xff]
    %v40 = vld [vmem:[%s0 + $0x30] sm:$0xff]
    %v41 = vpack.c.bf16 %v34, %v34
    %v42 = vpack.c.bf16 %v35, %v35
    %v43 = vpack.c.bf16 %v36, %v36
    %v44 = vpack.c.bf16 %v37, %v37
    %v45 = vpack.c.bf16 %v38, %v38
    %v46 = vpack.c.bf16 %v39, %v39
    %v47 = vpack.c.bf16 %v40, %v40
    %v48 = vld [vmem:[%s1] sm:$0xf]
    %v49 = vld [vmem:[%s1 + $0x4] sm:$0xf]
    %v50 = vld [vmem:[%s1 + $0x8] sm:$0xf]
    %v51 = vld [vmem:[%s1 + $0xc] sm:$0xf]
    %v52 = vld [vmem:[%s1 + $0x10] sm:$0xf]
    %v53 = vld [vmem:[%s1 + $0x14] sm:$0xf]
    %v54 = vld [vmem:[%s1 + $0x18] sm:$0xf]
    %v55 = vld [vmem:[%s1 + $0x1c] sm:$0xf]
    %v56 = vld [vmem:[%s1 + $0x20] sm:$0xf]
    %v57 = vld [vmem:[%s1 + $0x24] sm:$0xf]
    %v58 = vld [vmem:[%s1 + $0x28] sm:$0xf]
    %v59 = vld [vmem:[%s1 + $0x2c] sm:$0xf]
    %v60 = vld [vmem:[%s1 + $0x30] sm:$0xf]
    %v61 = vld [vmem:[%s1 + $0x34] sm:$0xf]
    %v62 = vld [vmem:[%s1 + $0x38] sm:$0xf]
    %v63 = vld [vmem:[%s1 + $0x3c] sm:$0xf]
    %v64 = vld [vmem:[%s1 + $0x40] sm:$0xf]
    %v65 = vld [vmem:[%s1 + $0x44] sm:$0xf]
    %v66 = vld [vmem:[%s1 + $0x48] sm:$0xf]
    %v67 = vld [vmem:[%s1 + $0x4c] sm:$0xf]
    %v68 = vld [vmem:[%s1 + $0x50] sm:$0xf]
    %v69 = vld [vmem:[%s1 + $0x54] sm:$0xf]
    %v70 = vld [vmem:[%s1 + $0x58] sm:$0xf]
    %v71 = vld [vmem:[%s1 + $0x5c] sm:$0xf]
    %v72 = vld [vmem:[%s1 + $0x60] sm:$0xf]
    %v73 = vld [vmem:[%s1 + $0x64] sm:$0xf]
    %v74 = vld [vmem:[%s1 + $0x68] sm:$0xf]
    %v75 = vld [vmem:[%s1 + $0x6c] sm:$0xf]
    %v76 = vld [vmem:[%s1 + $0x70] sm:$0xf]
    %v77 = vld [vmem:[%s1 + $0x74] sm:$0xf]
    %v78 = vld [vmem:[%s1 + $0x78] sm:$0xf]
    %v79 = vld [vmem:[%s1 + $0x7c] sm:$0xf]
    %v80 = vld [vmem:[%s1 + $0x80] sm:$0xf]
    %v81 = vld [vmem:[%s1 + $0x84] sm:$0xf]
    %v82 = vld [vmem:[%s1 + $0x88] sm:$0xf]
    %v83 = vld [vmem:[%s1 + $0x8c] sm:$0xf]
    %v84 = vld [vmem:[%s1 + $0x90] sm:$0xf]
    %v85 = vld [vmem:[%s1 + $0x94] sm:$0xf]
    %v86 = vld [vmem:[%s1 + $0x98] sm:$0xf]
    %v87 = vld [vmem:[%s1 + $0x9c] sm:$0xf]
    %v88 = vld [vmem:[%s1 + $0xa0] sm:$0xf]
    %v89 = vld [vmem:[%s1 + $0xa4] sm:$0xf]
    %v90 = vld [vmem:[%s1 + $0xa8] sm:$0xf]
    %v91 = vld [vmem:[%s1 + $0xac] sm:$0xf]
    %v92 = vld [vmem:[%s1 + $0xb0] sm:$0xf]
    %v93 = vld [vmem:[%s1 + $0xb4] sm:$0xf]
    %v94 = vld [vmem:[%s1 + $0xb8] sm:$0xf]
    %v95 = vld [vmem:[%s1 + $0xbc] sm:$0xf]
    %v96 = vld [vmem:[%s1 + $0xc0] sm:$0xf]
    %v97 = vld [vmem:[%s1 + $0xc4] sm:$0xf]
    %v98 = vld [vmem:[%s1 + $0xc8] sm:$0xf]
    %v99 = vld [vmem:[%s1 + $0xcc] sm:$0xf]
    %v100 = vld [vmem:[%s1 + $0xd0] sm:$0xf]
    %v101 = vld [vmem:[%s1 + $0xd4] sm:$0xf]
    %v102 = vld [vmem:[%s1 + $0xd8] sm:$0xf]
    %v103 = vld [vmem:[%s1 + $0xdc] sm:$0xf]
    %v104 = vld [vmem:[%s1 + $0xe0] sm:$0xf]
    %v105 = vld [vmem:[%s1 + $0xe4] sm:$0xf]
    %v106 = vld [vmem:[%s1 + $0xe8] sm:$0xf]
    %v107 = vld [vmem:[%s1 + $0xec] sm:$0xf]
    %v108 = vld [vmem:[%s1 + $0xf0] sm:$0xf]
    %v109 = vld [vmem:[%s1 + $0xf4] sm:$0xf]
    %v110 = vld [vmem:[%s1 + $0xf8] sm:$0xf]
    %v111 = vld [vmem:[%s1 + $0xfc] sm:$0xf]
    %v112 = vld [vmem:[%s1 + $0x100] sm:$0xf]
    %v113 = vld [vmem:[%s1 + $0x104] sm:$0xf]
    %v114 = vld [vmem:[%s1 + $0x108] sm:$0xf]
    %v115 = vld [vmem:[%s1 + $0x10c] sm:$0xf]
    %v116 = vld [vmem:[%s1 + $0x110] sm:$0xf]
    %v117 = vld [vmem:[%s1 + $0x114] sm:$0xf]
    %v118 = vld [vmem:[%s1 + $0x118] sm:$0xf]
    %v119 = vld [vmem:[%s1 + $0x11c] sm:$0xf]
    %v120 = vld [vmem:[%s1 + $0x120] sm:$0xf]
    %v121 = vld [vmem:[%s1 + $0x124] sm:$0xf]
    %v122 = vld [vmem:[%s1 + $0x128] sm:$0xf]
    %v123 = vld [vmem:[%s1 + $0x12c] sm:$0xf]
    %v124 = vld [vmem:[%s1 + $0x130] sm:$0xf]
    %v125 = vld [vmem:[%s1 + $0x134] sm:$0xf]
    %v126 = vld [vmem:[%s1 + $0x138] sm:$0xf]
    %v127 = vld [vmem:[%s1 + $0x13c] sm:$0xf]
    %v128 = vld [vmem:[%s1 + $0x140] sm:$0xf]
    %v129 = vld [vmem:[%s1 + $0x144] sm:$0xf]
    %v130 = vld [vmem:[%s1 + $0x148] sm:$0xf]
    %v131 = vld [vmem:[%s1 + $0x14c] sm:$0xf]
    %v132 = vld [vmem:[%s1 + $0x150] sm:$0xf]
    %v133 = vld [vmem:[%s1 + $0x154] sm:$0xf]
    %v134 = vld [vmem:[%s1 + $0x158] sm:$0xf]
    %v135 = vld [vmem:[%s1 + $0x15c] sm:$0xf]
    %v136 = vld [vmem:[%s1 + $0x160] sm:$0xf]
    %v137 = vld [vmem:[%s1 + $0x164] sm:$0xf]
    %v138 = vld [vmem:[%s1 + $0x168] sm:$0xf]
    %v139 = vld [vmem:[%s1 + $0x16c] sm:$0xf]
    %v140 = vld [vmem:[%s1 + $0x170] sm:$0xf]
    %v141 = vld [vmem:[%s1 + $0x174] sm:$0xf]
    %v142 = vld [vmem:[%s1 + $0x178] sm:$0xf]
    %v143 = vld [vmem:[%s1 + $0x17c] sm:$0xf]
    %v144 = vld [vmem:[%s1 + $0x180] sm:$0xf]
    %v145 = vld [vmem:[%s1 + $0x184] sm:$0xf]
    %v146 = vld [vmem:[%s2] sm:$0x1]
    %v148 = vlaneseq
    %v149 = vshrl.u32 %v148, 7
    %v150 = vsub.s32 0, %v149
    %v151 = vrot.slane %v146, %v150
    %v251 = vunpack.c.l.b16 %v48
    %v252 = vunpack.c.l.b16 %v49
    %v253 = vunpack.c.l.b16 %v50
    %v254 = vunpack.c.l.b16 %v51
    %v255 = vunpack.c.l.b16 %v52
    %v256 = vunpack.c.l.b16 %v53
    %v257 = vunpack.c.l.b16 %v54
    %v258 = vunpack.c.l.b16 %v55
    %v259 = vunpack.c.l.b16 %v56
    %v260 = vunpack.c.l.b16 %v57
    %v261 = vunpack.c.l.b16 %v58
    %v262 = vunpack.c.l.b16 %v59
    %v263 = vunpack.c.l.b16 %v60
    %v264 = vunpack.c.l.b16 %v61
    %v265 = vunpack.c.l.b16 %v62
    %v266 = vunpack.c.l.b16 %v63
    %v267 = vunpack.c.l.b16 %v64
    %v268 = vunpack.c.l.b16 %v65
    %v269 = vunpack.c.l.b16 %v66
    %v270 = vunpack.c.l.b16 %v67
    %v271 = vunpack.c.l.b16 %v68
    %v272 = vunpack.c.l.b16 %v69
    %v273 = vunpack.c.l.b16 %v70
    %v274 = vunpack.c.l.b16 %v71
    %v275 = vunpack.c.l.b16 %v72
    %v276 = vunpack.c.l.b16 %v73
    %v277 = vunpack.c.l.b16 %v74
    %v278 = vunpack.c.l.b16 %v75
    %v279 = vunpack.c.l.b16 %v76
    %v280 = vunpack.c.l.b16 %v77
    %v281 = vunpack.c.l.b16 %v78
    %v282 = vunpack.c.l.b16 %v79
    %v283 = vunpack.c.l.b16 %v80
    %v284 = vunpack.c.l.b16 %v81
    %v285 = vunpack.c.l.b16 %v82
    %v286 = vunpack.c.l.b16 %v83
    %v287 = vunpack.c.l.b16 %v84
    %v288 = vunpack.c.l.b16 %v85
    %v289 = vunpack.c.l.b16 %v86
    %v290 = vunpack.c.l.b16 %v87
    %v291 = vunpack.c.l.b16 %v88
    %v292 = vunpack.c.l.b16 %v89
    %v293 = vunpack.c.l.b16 %v90
    %v294 = vunpack.c.l.b16 %v91
    %v295 = vunpack.c.l.b16 %v92
    %v296 = vunpack.c.l.b16 %v93
    %v297 = vunpack.c.l.b16 %v94
    %v298 = vunpack.c.l.b16 %v95
    %v299 = vunpack.c.l.b16 %v96
    %v300 = vunpack.c.l.b16 %v97
    %v301 = vunpack.c.l.b16 %v98
    %v302 = vunpack.c.l.b16 %v99
    %v303 = vunpack.c.l.b16 %v100
    %v304 = vunpack.c.l.b16 %v101
    %v305 = vunpack.c.l.b16 %v102
    %v306 = vunpack.c.l.b16 %v103
    %v307 = vunpack.c.l.b16 %v104
    %v308 = vunpack.c.l.b16 %v105
    %v309 = vunpack.c.l.b16 %v106
    %v310 = vunpack.c.l.b16 %v107
    %v311 = vunpack.c.l.b16 %v108
    %v312 = vunpack.c.l.b16 %v109
    %v313 = vunpack.c.l.b16 %v110
    %v314 = vunpack.c.l.b16 %v111
    %v315 = vunpack.c.l.b16 %v112
    %v316 = vunpack.c.l.b16 %v113
    %v317 = vunpack.c.l.b16 %v114
    %v318 = vunpack.c.l.b16 %v115
    %v319 = vunpack.c.l.b16 %v116
    %v320 = vunpack.c.l.b16 %v117
    %v321 = vunpack.c.l.b16 %v118
    %v322 = vunpack.c.l.b16 %v119
    %v323 = vunpack.c.l.b16 %v120
    %v324 = vunpack.c.l.b16 %v121
    %v325 = vunpack.c.l.b16 %v122
    %v326 = vunpack.c.l.b16 %v123
    %v327 = vunpack.c.l.b16 %v124
    %v328 = vunpack.c.l.b16 %v125
    %v329 = vunpack.c.l.b16 %v126
    %v330 = vunpack.c.l.b16 %v127
    %v331 = vunpack.c.l.b16 %v128
    %v332 = vunpack.c.l.b16 %v129
    %v333 = vunpack.c.l.b16 %v130
    %v334 = vunpack.c.l.b16 %v131
    %v335 = vunpack.c.l.b16 %v132
    %v336 = vunpack.c.l.b16 %v133
    %v337 = vunpack.c.l.b16 %v134
    %v338 = vunpack.c.l.b16 %v135
    %v339 = vunpack.c.l.b16 %v136
    %v340 = vunpack.c.l.b16 %v137
    %v341 = vunpack.c.l.b16 %v138
    %v342 = vunpack.c.l.b16 %v139
    %v343 = vunpack.c.l.b16 %v140
    %v344 = vunpack.c.l.b16 %v141
    %v345 = vunpack.c.l.b16 %v142
    %v346 = vunpack.c.l.b16 %v143
    %v347 = vunpack.c.l.b16 %v144
    %v348 = vunpack.c.l.b16 %v145
    %v349 = vpack.c.b16 %v252, %v251
    %v350 = vpack.c.b16 %v254, %v253
    %v351 = vpack.c.b16 %v256, %v255
    %v352 = vpack.c.b16 %v258, %v257
    %v353 = vpack.c.b16 %v260, %v259
    %v354 = vpack.c.b16 %v262, %v261
    %v355 = vpack.c.b16 %v264, %v263
    %v356 = vpack.c.b16 %v266, %v265
    %v357 = vpack.c.b16 %v268, %v267
    %v358 = vpack.c.b16 %v270, %v269
    %v359 = vpack.c.b16 %v272, %v271
    %v360 = vpack.c.b16 %v274, %v273
    %v361 = vpack.c.b16 %v276, %v275
    %v362 = vpack.c.b16 %v278, %v277
    %v363 = vpack.c.b16 %v280, %v279
    %v364 = vpack.c.b16 %v282, %v281
    %v365 = vpack.c.b16 %v284, %v283
    %v366 = vpack.c.b16 %v286, %v285
    %v367 = vpack.c.b16 %v288, %v287
    %v368 = vpack.c.b16 %v290, %v289
    %v369 = vpack.c.b16 %v292, %v291
    %v370 = vpack.c.b16 %v294, %v293
    %v371 = vpack.c.b16 %v296, %v295
    %v372 = vpack.c.b16 %v298, %v297
    %v373 = vpack.c.b16 %v300, %v299
    %v374 = vpack.c.b16 %v302, %v301
    %v375 = vpack.c.b16 %v304, %v303
    %v376 = vpack.c.b16 %v306, %v305
    %v377 = vpack.c.b16 %v308, %v307
    %v378 = vpack.c.b16 %v310, %v309
    %v379 = vpack.c.b16 %v312, %v311
    %v380 = vpack.c.b16 %v314, %v313
    %v381 = vpack.c.b16 %v316, %v315
    %v382 = vpack.c.b16 %v318, %v317
    %v383 = vpack.c.b16 %v320, %v319
    %v384 = vpack.c.b16 %v322, %v321
    %v385 = vpack.c.b16 %v324, %v323
    %v386 = vpack.c.b16 %v326, %v325
    %v387 = vpack.c.b16 %v328, %v327
    %v388 = vpack.c.b16 %v330, %v329
    %v389 = vpack.c.b16 %v332, %v331
    %v390 = vpack.c.b16 %v334, %v333
    %v391 = vpack.c.b16 %v336, %v335
    %v392 = vpack.c.b16 %v338, %v337
    %v393 = vpack.c.b16 %v340, %v339
    %v394 = vpack.c.b16 %v342, %v341
    %v395 = vpack.c.b16 %v344, %v343
    %v396 = vpack.c.b16 %v346, %v345
    %v397 = vpack.c.b16 %v348, %v347
    %vm447 = vcmask 130048
    %v449 = vsel %vm447, %v47, 0
    %451 = vmatprep.subr.bf16.mxu0 0
    %452 = vmatpush1.bf16.msra.mxu0 %v349
    %453 = vmatprep.subr.bf16.mxu0 0
    %454 = vmatpush1.bf16.msra.mxu0 %v350
    %455 = vmatprep.subr.bf16.mxu0 0
    %456 = vmatpush1.bf16.msra.mxu0 %v351
    %457 = vmatprep.subr.bf16.mxu0 0
    %458 = vmatpush1.bf16.msra.mxu0 %v352
    %459 = vmatprep.subr.bf16.mxu0 0
    %460 = vmatpush1.bf16.msra.mxu0 %v353
    %461 = vmatprep.subr.bf16.mxu0 0
    %462 = vmatpush1.bf16.msra.mxu0 %v354
    %463 = vmatprep.subr.bf16.mxu0 0
    %464 = vmatpush1.bf16.msra.mxu0 %v355
    %465 = vmatprep.subr.bf16.mxu0 0
    %466 = vmatpush1.bf16.msra.mxu0 %v356
    %467 = vmatprep.subr.bf16.mxu0 0
    %468 = vmatpush1.bf16.msra.mxu0 %v357
    %469 = vmatprep.subr.bf16.mxu0 0
    %470 = vmatpush1.bf16.msra.mxu0 %v358
    %471 = vmatprep.subr.bf16.mxu0 0
    %472 = vmatpush1.bf16.msra.mxu0 %v359
    %473 = vmatprep.subr.bf16.mxu0 0
    %474 = vmatpush1.bf16.msra.mxu0 %v360
    %475 = vmatprep.subr.bf16.mxu0 0
    %476 = vmatpush1.bf16.msra.mxu0 %v361
    %477 = vmatprep.subr.bf16.mxu0 0
    %478 = vmatpush1.bf16.msra.mxu0 %v362
    %479 = vmatprep.subr.bf16.mxu0 0
    %480 = vmatpush1.bf16.msra.mxu0 %v363
    %481 = vmatprep.subr.bf16.mxu0 0
    %482 = vmatpush1.bf16.msra.mxu0 %v364
    %483 = vmatprep.mubr.bf16.mxu0 %v42
    %484 = vmatmul.mubr.bf16.gmra.mrb[0].mxu0 %v41
    %v485 = vpop.f32.mrb[0].mxu0
    %v486 = vadd.f32 %v151, %v485
    %v487 = vpop.f32.mrb[0].mxu0
    %v488 = vpop.f32.mrb[0].mxu0
    %v489 = vpop.f32.mrb[0].mxu0
    %490 = vdwg.mxu0
    %491 = vmatprep.subr.bf16.mxu0 0
    %492 = vmatpush1.bf16.msra.mxu0 %v365
    %493 = vmatprep.subr.bf16.mxu0 0
    %494 = vmatpush1.bf16.msra.mxu0 %v366
    %495 = vmatprep.subr.bf16.mxu0 0
    %496 = vmatpush1.bf16.msra.mxu0 %v367
    %497 = vmatprep.subr.bf16.mxu0 0
    %498 = vmatpush1.bf16.msra.mxu0 %v368
    %499 = vmatprep.subr.bf16.mxu0 0
    %500 = vmatpush1.bf16.msra.mxu0 %v369
    %501 = vmatprep.subr.bf16.mxu0 0
    %502 = vmatpush1.bf16.msra.mxu0 %v370
    %503 = vmatprep.subr.bf16.mxu0 0
    %504 = vmatpush1.bf16.msra.mxu0 %v371
    %505 = vmatprep.subr.bf16.mxu0 0
    %506 = vmatpush1.bf16.msra.mxu0 %v372
    %507 = vmatprep.subr.bf16.mxu0 0
    %508 = vmatpush1.bf16.msra.mxu0 %v373
    %509 = vmatprep.subr.bf16.mxu0 0
    %510 = vmatpush1.bf16.msra.mxu0 %v374
    %511 = vmatprep.subr.bf16.mxu0 0
    %512 = vmatpush1.bf16.msra.mxu0 %v375
    %513 = vmatprep.subr.bf16.mxu0 0
    %514 = vmatpush1.bf16.msra.mxu0 %v376
    %515 = vmatprep.subr.bf16.mxu0 0
    %516 = vmatpush1.bf16.msra.mxu0 %v377
    %517 = vmatprep.subr.bf16.mxu0 0
    %518 = vmatpush1.bf16.msra.mxu0 %v378
    %519 = vmatprep.subr.bf16.mxu0 0
    %520 = vmatpush1.bf16.msra.mxu0 %v379
    %521 = vmatprep.subr.bf16.mxu0 0
    %522 = vmatpush1.bf16.msra.mxu0 %v380
    %523 = vmatprep.mubr.bf16.mxu0 %v44
    %524 = vmatmul.mubr.bf16.gmra.mrb[0].mxu0 %v43
    %v525 = vpop.f32.mrb[0].mxu0
    %v526 = vadd.f32 %v486, %v525
    %v527 = vpop.f32.mrb[0].mxu0
    %v528 = vpop.f32.mrb[0].mxu0
    %v529 = vpop.f32.mrb[0].mxu0
    %530 = vdwg.mxu0
    %531 = vmatprep.subr.bf16.mxu0 0
    %532 = vmatpush1.bf16.msra.mxu0 %v381
    %533 = vmatprep.subr.bf16.mxu0 0
    %534 = vmatpush1.bf16.msra.mxu0 %v382
    %535 = vmatprep.subr.bf16.mxu0 0
    %536 = vmatpush1.bf16.msra.mxu0 %v383
    %537 = vmatprep.subr.bf16.mxu0 0
    %538 = vmatpush1.bf16.msra.mxu0 %v384
    %539 = vmatprep.subr.bf16.mxu0 0
    %540 = vmatpush1.bf16.msra.mxu0 %v385
    %541 = vmatprep.subr.bf16.mxu0 0
    %542 = vmatpush1.bf16.msra.mxu0 %v386
    %543 = vmatprep.subr.bf16.mxu0 0
    %544 = vmatpush1.bf16.msra.mxu0 %v387
    %545 = vmatprep.subr.bf16.mxu0 0
    %546 = vmatpush1.bf16.msra.mxu0 %v388
    %547 = vmatprep.subr.bf16.mxu0 0
    %548 = vmatpush1.bf16.msra.mxu0 %v389
    %549 = vmatprep.subr.bf16.mxu0 0
    %550 = vmatpush1.bf16.msra.mxu0 %v390
    %551 = vmatprep.subr.bf16.mxu0 0
    %552 = vmatpush1.bf16.msra.mxu0 %v391
    %553 = vmatprep.subr.bf16.mxu0 0
    %554 = vmatpush1.bf16.msra.mxu0 %v392
    %555 = vmatprep.subr.bf16.mxu0 0
    %556 = vmatpush1.bf16.msra.mxu0 %v393
    %557 = vmatprep.subr.bf16.mxu0 0
    %558 = vmatpush1.bf16.msra.mxu0 %v394
    %559 = vmatprep.subr.bf16.mxu0 0
    %560 = vmatpush1.bf16.msra.mxu0 %v395
    %561 = vmatprep.subr.bf16.mxu0 0
    %562 = vmatpush1.bf16.msra.mxu0 %v396
    %563 = vmatprep.mubr.bf16.mxu0 %v46
    %564 = vmatmul.mubr.bf16.gmra.mrb[0].mxu0 %v45
    %v565 = vpop.f32.mrb[0].mxu0
    %v566 = vadd.f32 %v526, %v565
    %v567 = vpop.f32.mrb[0].mxu0
    %v568 = vpop.f32.mrb[0].mxu0
    %v569 = vpop.f32.mrb[0].mxu0
    %570 = vdwg.mxu0
    %571 = vmatprep.subr.bf16.mxu0 0
    %572 = vmatpush1.bf16.msra.mxu0 %v397
    %573 = vmatprep.subr.bf16.mxu0 0
    %574 = vmatpush1.bf16.msra.mxu0 0
    %575 = vmatprep.subr.bf16.mxu0 0
    %576 = vmatpush1.bf16.msra.mxu0 0
    %577 = vmatprep.subr.bf16.mxu0 0
    %578 = vmatpush1.bf16.msra.mxu0 0
    %579 = vmatprep.subr.bf16.mxu0 0
    %580 = vmatpush1.bf16.msra.mxu0 0
    %581 = vmatprep.subr.bf16.mxu0 0
    %582 = vmatpush1.bf16.msra.mxu0 0
    %583 = vmatprep.subr.bf16.mxu0 0
    %584 = vmatpush1.bf16.msra.mxu0 0
    %585 = vmatprep.subr.bf16.mxu0 0
    %586 = vmatpush1.bf16.msra.mxu0 0
    %587 = vmatprep.subr.bf16.mxu0 0
    %588 = vmatpush1.bf16.msra.mxu0 0
    %589 = vmatprep.subr.bf16.mxu0 0
    %590 = vmatpush1.bf16.msra.mxu0 0
    %591 = vmatprep.subr.bf16.mxu0 0
    %592 = vmatpush1.bf16.msra.mxu0 0
    %593 = vmatprep.subr.bf16.mxu0 0
    %594 = vmatpush1.bf16.msra.mxu0 0
    %595 = vmatprep.subr.bf16.mxu0 0
    %596 = vmatpush1.bf16.msra.mxu0 0
    %597 = vmatprep.subr.bf16.mxu0 0
    %598 = vmatpush1.bf16.msra.mxu0 0
    %599 = vmatprep.subr.bf16.mxu0 0
    %600 = vmatpush1.bf16.msra.mxu0 0
    %601 = vmatprep.subr.bf16.mxu0 0
    %602 = vmatpush1.bf16.msra.mxu0 0
    %603 = vmatprep.mubr.bf16.mxu0 0
    %604 = vmatmul.mubr.bf16.gmra.mrb[0].mxu0 %v449
    %v605 = vpop.f32.mrb[0].mxu0
    %v606 = vadd.f32 %v566, %v605
    %v607 = vpop.f32.mrb[0].mxu0
    %v608 = vpop.f32.mrb[0].mxu0
    %v609 = vpop.f32.mrb[0].mxu0
    %610 = vdwg.mxu0
    %v611 = vmax.f32 %v606, 0.0
    %v612 = vpack.c.bf16 %v611, %v611
    %v613 = vld [vmem:[%s3] sm:$0xf]
    %v614 = vld [vmem:[%s3 + $0x4] sm:$0xf]
    %v615 = vld [vmem:[%s3 + $0x8] sm:$0xf]
    %v616 = vld [vmem:[%s3 + $0xc] sm:$0xf]
    %v617 = vld [vmem:[%s4] sm:$0x1]
    %v619 = vlaneseq
    %v620 = vshrl.u32 %v619, 7
    %v621 = vsub.s32 0, %v620
    %v622 = vrot.slane %v617, %v621
    %v628 = vunpack.c.l.b16 %v613
    %v629 = vunpack.c.l.b16 %v614
    %v630 = vunpack.c.l.b16 %v615
    %v631 = vunpack.c.l.b16 %v616
    %v632 = vpack.c.b16 %v629, %v628
    %v633 = vpack.c.b16 %v631, %v630
    %vm636 = vcmask 261120
    %v638 = vsel %vm636, %v612, 0
    %640 = vmatprep.subr.bf16.mxu0 0
    %641 = vmatpush1.bf16.msra.mxu0 %v632
    %642 = vmatprep.subr.bf16.mxu0 0
    %643 = vmatpush1.bf16.msra.mxu0 %v633
    %644 = vmatprep.subr.bf16.mxu0 0
    %645 = vmatpush1.bf16.msra.mxu0 0
    %646 = vmatprep.subr.bf16.mxu0 0
    %647 = vmatpush1.bf16.msra.mxu0 0
    %648 = vmatprep.subr.bf16.mxu0 0
    %649 = vmatpush1.bf16.msra.mxu0 0
    %650 = vmatprep.subr.bf16.mxu0 0
    %651 = vmatpush1.bf16.msra.mxu0 0
    %652 = vmatprep.subr.bf16.mxu0 0
    %653 = vmatpush1.bf16.msra.mxu0 0
    %654 = vmatprep.subr.bf16.mxu0 0
    %655 = vmatpush1.bf16.msra.mxu0 0
    %656 = vmatprep.subr.bf16.mxu0 0
    %657 = vmatpush1.bf16.msra.mxu0 0
    %658 = vmatprep.subr.bf16.mxu0 0
    %659 = vmatpush1.bf16.msra.mxu0 0
    %660 = vmatprep.subr.bf16.mxu0 0
    %661 = vmatpush1.bf16.msra.mxu0 0
    %662 = vmatprep.subr.bf16.mxu0 0
    %663 = vmatpush1.bf16.msra.mxu0 0
    %664 = vmatprep.subr.bf16.mxu0 0
    %665 = vmatpush1.bf16.msra.mxu0 0
    %666 = vmatprep.subr.bf16.mxu0 0
    %667 = vmatpush1.bf16.msra.mxu0 0
    %668 = vmatprep.subr.bf16.mxu0 0
    %669 = vmatpush1.bf16.msra.mxu0 0
    %670 = vmatprep.subr.bf16.mxu0 0
    %671 = vmatpush1.bf16.msra.mxu0 0
    %672 = vmatprep.mubr.bf16.mxu0 0
    %673 = vmatmul.mubr.bf16.gmra.mrb[0].mxu0 %v638
    %v674 = vpop.f32.mrb[0].mxu0
    %v675 = vadd.f32 %v622, %v674
    %v676 = vpop.f32.mrb[0].mxu0
    %v677 = vpop.f32.mrb[0].mxu0
    %v678 = vpop.f32.mrb[0].mxu0
    %679 = vdwg.mxu0
    %v680 = vmax.f32 %v675, 0.0
    %v681 = vpack.c.bf16 %v680, %v680
    %v682 = vld [vmem:[%s5] sm:$0xf]
    %v683 = vld [vmem:[%s5 + $0x4] sm:$0xf]
    %v684 = vld [vmem:[%s5 + $0x8] sm:$0xf]
    %v685 = vld [vmem:[%s5 + $0xc] sm:$0xf]
    %v686 = vld [vmem:[%s5 + $0x10] sm:$0xf]
    %v687 = vld [vmem:[%s5 + $0x14] sm:$0xf]
    %v688 = vld [vmem:[%s5 + $0x18] sm:$0xf]
    %v689 = vld [vmem:[%s5 + $0x1c] sm:$0xf]
    %v690 = vld [vmem:[%s6] sm:$0x1]
    %v692 = vlaneseq
    %v693 = vshrl.u32 %v692, 7
    %v694 = vsub.s32 0, %v693
    %v695 = vrot.slane %v690, %v694
    %v705 = vunpack.c.l.b16 %v682
    %v706 = vunpack.c.l.b16 %v683
    %v707 = vunpack.c.l.b16 %v684
    %v708 = vunpack.c.l.b16 %v685
    %v709 = vunpack.c.l.b16 %v686
    %v710 = vunpack.c.l.b16 %v687
    %v711 = vunpack.c.l.b16 %v688
    %v712 = vunpack.c.l.b16 %v689
    %v713 = vpack.c.b16 %v706, %v705
    %v714 = vpack.c.b16 %v708, %v707
    %v715 = vpack.c.b16 %v710, %v709
    %v716 = vpack.c.b16 %v712, %v711
    %vm721 = vcmask 523264
    %v723 = vsel %vm721, %v681, 0
    %725 = vmatprep.subr.bf16.mxu0 0
    %726 = vmatpush1.bf16.msra.mxu0 %v713
    %727 = vmatprep.subr.bf16.mxu0 0
    %728 = vmatpush1.bf16.msra.mxu0 %v714
    %729 = vmatprep.subr.bf16.mxu0 0
    %730 = vmatpush1.bf16.msra.mxu0 %v715
    %731 = vmatprep.subr.bf16.mxu0 0
    %732 = vmatpush1.bf16.msra.mxu0 %v716
    %733 = vmatprep.subr.bf16.mxu0 0
    %734 = vmatpush1.bf16.msra.mxu0 0
    %735 = vmatprep.subr.bf16.mxu0 0
    %736 = vmatpush1.bf16.msra.mxu0 0
    %737 = vmatprep.subr.bf16.mxu0 0
    %738 = vmatpush1.bf16.msra.mxu0 0
    %739 = vmatprep.subr.bf16.mxu0 0
    %740 = vmatpush1.bf16.msra.mxu0 0
    %741 = vmatprep.subr.bf16.mxu0 0
    %742 = vmatpush1.bf16.msra.mxu0 0
    %743 = vmatprep.subr.bf16.mxu0 0
    %744 = vmatpush1.bf16.msra.mxu0 0
    %745 = vmatprep.subr.bf16.mxu0 0
    %746 = vmatpush1.bf16.msra.mxu0 0
    %747 = vmatprep.subr.bf16.mxu0 0
    %748 = vmatpush1.bf16.msra.mxu0 0
    %749 = vmatprep.subr.bf16.mxu0 0
    %750 = vmatpush1.bf16.msra.mxu0 0
    %751 = vmatprep.subr.bf16.mxu0 0
    %752 = vmatpush1.bf16.msra.mxu0 0
    %753 = vmatprep.subr.bf16.mxu0 0
    %754 = vmatpush1.bf16.msra.mxu0 0
    %755 = vmatprep.subr.bf16.mxu0 0
    %756 = vmatpush1.bf16.msra.mxu0 0
    %757 = vmatprep.mubr.bf16.mxu0 0
    %758 = vmatmul.mubr.bf16.gmra.mrb[0].mxu0 %v723
    %v759 = vpop.f32.mrb[0].mxu0
    %v760 = vadd.f32 %v695, %v759
    %v761 = vpop.f32.mrb[0].mxu0
    %v762 = vpop.f32.mrb[0].mxu0
    %v763 = vpop.f32.mrb[0].mxu0
    %764 = vdwg.mxu0
    %v765 = vmax.f32 %v760, 0.0
    %v766 = vpack.c.bf16 %v765, %v765
    %v767 = vld [vmem:[%s7] sm:$0xf]
    %v768 = vld [vmem:[%s7 + $0x4] sm:$0xf]
    %v769 = vld [vmem:[%s7 + $0x8] sm:$0xf]
    %v770 = vld [vmem:[%s7 + $0xc] sm:$0xf]
    %v771 = vld [vmem:[%s7 + $0x10] sm:$0xf]
    %v772 = vld [vmem:[%s7 + $0x14] sm:$0xf]
    %v773 = vld [vmem:[%s7 + $0x18] sm:$0xf]
    %v774 = vld [vmem:[%s7 + $0x1c] sm:$0xf]
    %v775 = vld [vmem:[%s7 + $0x20] sm:$0xf]
    %v776 = vld [vmem:[%s7 + $0x24] sm:$0xf]
    %v777 = vld [vmem:[%s7 + $0x28] sm:$0xf]
    %v778 = vld [vmem:[%s7 + $0x2c] sm:$0xf]
    %v779 = vld [vmem:[%s7 + $0x30] sm:$0xf]
    %v780 = vld [vmem:[%s7 + $0x34] sm:$0xf]
    %v781 = vld [vmem:[%s7 + $0x38] sm:$0xf]
    %v782 = vld [vmem:[%s7 + $0x3c] sm:$0xf]
    %v783 = vld [vmem:[%s8] sm:$0x1]
    %v785 = vlaneseq
    %v786 = vshrl.u32 %v785, 7
    %v787 = vsub.s32 0, %v786
    %v788 = vrot.slane %v783, %v787
    %v806 = vunpack.c.l.b16 %v767
    %v807 = vunpack.c.l.b16 %v768
    %v808 = vunpack.c.l.b16 %v769
    %v809 = vunpack.c.l.b16 %v770
    %v810 = vunpack.c.l.b16 %v771
    %v811 = vunpack.c.l.b16 %v772
    %v812 = vunpack.c.l.b16 %v773
    %v813 = vunpack.c.l.b16 %v774
    %v814 = vunpack.c.l.b16 %v775
    %v815 = vunpack.c.l.b16 %v776
    %v816 = vunpack.c.l.b16 %v777
    %v817 = vunpack.c.l.b16 %v778
    %v818 = vunpack.c.l.b16 %v779
    %v819 = vunpack.c.l.b16 %v780
    %v820 = vunpack.c.l.b16 %v781
    %v821 = vunpack.c.l.b16 %v782
    %v822 = vpack.c.b16 %v807, %v806
    %v823 = vpack.c.b16 %v809, %v808
    %v824 = vpack.c.b16 %v811, %v810
    %v825 = vpack.c.b16 %v813, %v812
    %v826 = vpack.c.b16 %v815, %v814
    %v827 = vpack.c.b16 %v817, %v816
    %v828 = vpack.c.b16 %v819, %v818
    %v829 = vpack.c.b16 %v821, %v820
    %838 = vmatprep.subr.bf16.mxu0 0
    %839 = vmatpush1.bf16.msra.mxu0 %v822
    %840 = vmatprep.subr.bf16.mxu0 0
    %841 = vmatpush1.bf16.msra.mxu0 %v823
    %842 = vmatprep.subr.bf16.mxu0 0
    %843 = vmatpush1.bf16.msra.mxu0 %v824
    %844 = vmatprep.subr.bf16.mxu0 0
    %845 = vmatpush1.bf16.msra.mxu0 %v825
    %846 = vmatprep.subr.bf16.mxu0 0
    %847 = vmatpush1.bf16.msra.mxu0 %v826
    %848 = vmatprep.subr.bf16.mxu0 0
    %849 = vmatpush1.bf16.msra.mxu0 %v827
    %850 = vmatprep.subr.bf16.mxu0 0
    %851 = vmatpush1.bf16.msra.mxu0 %v828
    %852 = vmatprep.subr.bf16.mxu0 0
    %853 = vmatpush1.bf16.msra.mxu0 %v829
    %854 = vmatprep.subr.bf16.mxu0 0
    %855 = vmatpush1.bf16.msra.mxu0 0
    %856 = vmatprep.subr.bf16.mxu0 0
    %857 = vmatpush1.bf16.msra.mxu0 0
    %858 = vmatprep.subr.bf16.mxu0 0
    %859 = vmatpush1.bf16.msra.mxu0 0
    %860 = vmatprep.subr.bf16.mxu0 0
    %861 = vmatpush1.bf16.msra.mxu0 0
    %862 = vmatprep.subr.bf16.mxu0 0
    %863 = vmatpush1.bf16.msra.mxu0 0
    %864 = vmatprep.subr.bf16.mxu0 0
    %865 = vmatpush1.bf16.msra.mxu0 0
    %866 = vmatprep.subr.bf16.mxu0 0
    %867 = vmatpush1.bf16.msra.mxu0 0
    %868 = vmatprep.subr.bf16.mxu0 0
    %869 = vmatpush1.bf16.msra.mxu0 0
    %870 = vmatprep.mubr.bf16.mxu0 0
    %871 = vmatmul.mubr.bf16.gmra.mrb[0].mxu0 %v766
    %v872 = vpop.f32.mrb[0].mxu0
    %v873 = vadd.f32 %v788, %v872
    %v874 = vpop.f32.mrb[0].mxu0
    %v875 = vpop.f32.mrb[0].mxu0
    %v876 = vpop.f32.mrb[0].mxu0
    %877 = vdwg.mxu0
    %v878 = vmax.f32 %v873, 0.0
    %vm879 = vcmask 80896
    %v880 = vsel %vm879, %v878, -inf
    %881 = vmax.xlane.f32.xlu0 %v880
    %v882 = vpop.xlane.xlu0 %881
    %v883 = vsub.f32 %v878, %v882
    %v884 = vmul.f32 %v883, 1.442695
    %v885 = vpow.pop %v884
    %v886 = vsel %vm879, %v885, 0.0
    %887 = vadd.xlane.f32.xlu0 %v886
    %v888 = vpop.xlane.xlu0 %887
    %v889 = vrcp.pop %v888
    %v890 = vmul.f32 %v885, %v889
    %891 = vst.msk [vmem:[#allocation2] sm:$0xff] %vm879, %v890
    // Predicated region
    $region38: #{_lambda_.1} parent=1 // pred_check
      _
    $region39: #{_lambda_.1} parent=1 // pred_check_branch
      %893 = sbr.rel (0) target = $region41
    $region40: #{_lambda_.1} parent=1 // pred_region
      %s895 = ssub.s32 128, 128
      %896 = vsyncadd [#allocation3], %s895
      %s898 = sshll.u32 [#allocation2], 4
      %s899 = int_to_ptr.vmem [resolvable:$true] %s898
      %901 = dma.vmem_to_hbm [thread:$0]  %s899, 128, %s9, [#allocation3]
    $region41: #{_lambda_.1} parent=1 // pred_fallthru
      _
    // Predicated region
    $region42: #{_lambda_.1} parent=1 // pred_check
      _
    $region43: #{_lambda_.1} parent=1 // pred_check_branch
      %903 = sbr.rel (0) target = $region45
    $region44: #{_lambda_.1} parent=1 // pred_region
      %904 = dma.done [#allocation3], 128
    $region45: #{_lambda_.1} parent=1 // pred_fallthru
      _
    %905 = vsyncpa [#allocation3], 1

</llo_original>
